<compile_context>
chip_gen: v7x
topology: tpu7x:2x2x1
jax: 0.10.0
libtpu: 0.0.40
codegen_flags: <defaults>
</compile_context>

<pallas_src>
import jax
import jax.numpy as jnp
from jax.experimental import pallas as pl
from jax.experimental.pallas import tpu as pltpu


def _round_up(x: int, m: int) -> int:
    return (x + m - 1) // m * m


def _cdiv(a: int, b: int) -> int:
    return (a + b - 1) // b


def _classifier_kernel(x_ref, w_ref, b_ref, o_ref):
    # x_ref: (TB, D) bf16/f32 feature tile in VMEM
    # w_ref: (D, 1)  classifier weight column (same dtype as x) in VMEM
    # b_ref: (1, 1)  f32 scalar bias in SMEM
    # o_ref: (TB, 1) f32 logits in VMEM
    #
    # Standard MXU GEMV with f32 accumulation: no transpose of the big input
    # tile; the tiny (TB, 1) result store hides under the (TB, D) input DMA,
    # so the kernel runs at the HBM roofline.
    y = jnp.dot(x_ref[...], w_ref[...], preferred_element_type=jnp.float32)
    o_ref[...] = y + b_ref[0, 0]


def clip_text_classifier_head(text_embeds, weight, bias, *, tb=8192):
    """Linear(D, 1) + squeeze(1) on CLIP text embeddings.

    text_embeds: (B, D) features (bf16 recommended; streamed as-is from HBM)
    weight:      (1, D) nn.Linear(D, 1).weight
    bias:        (1,)   nn.Linear(D, 1).bias
    Returns (B,) float32 logits.
    """
    B, D = text_embeds.shape
    if B == 0:
        return jnp.zeros((0,), jnp.float32)

    w_col = weight.reshape(D, 1).astype(text_embeds.dtype)        # (D, 1)
    bias_smem = jnp.asarray(bias, jnp.float32).reshape(1, 1)      # SMEM scalar

    # Tile selection:
    #   * tiny / online batches (B <= 512): one block equal to the full array
    #     (always layout-legal, grid of 1 -- dispatch overhead dominates these
    #     shapes anyway; prefer fusing the head into the encoder for them).
    #   * large offline batches: 128-multiple tiles capped at `tb`, with at
    #     least 2 grid steps so v7x can shard the stream over both TCs.
    tb = max(128, _round_up(tb, 128))
    if B <= 512:
        tb_eff = B
    else:
        tb_eff = max(128, min(tb, _round_up(_cdiv(B, 2), 128)))
    grid = _cdiv(B, tb_eff)

    itemsize = jnp.dtype(text_embeds.dtype).itemsize
    cost = pl.CostEstimate(
        flops=2 * B * D,
        transcendentals=0,
        bytes_accessed=B * D * itemsize + D * itemsize + B * 4,
    )

    out = pl.pallas_call(
        _classifier_kernel,
        out_shape=jax.ShapeDtypeStruct((B, 1), jnp.float32),
        grid_spec=pltpu.PrefetchScalarGridSpec(
            num_scalar_prefetch=0,
            grid=(grid,),
            in_specs=[
                pl.BlockSpec((tb_eff, D), lambda i: (i, 0)),        # feature tile
                pl.BlockSpec((D, 1), lambda i: (0, 0)),             # weight column
                pl.BlockSpec(memory_space=pltpu.MemorySpace.SMEM),  # scalar bias
            ],
            out_specs=pl.BlockSpec((tb_eff, 1), lambda i: (i, 0)),
        ),
        compiler_params=pltpu.CompilerParams(
            dimension_semantics=("parallel",),   # shards grid steps on v7x's 2 TCs
            vmem_limit_bytes=32 * 1024 * 1024,   # safe on v5e/v6e/v7x
        ),
        cost_estimate=cost,
    )(text_embeds, w_col, bias_smem)

    # squeeze(1) in the PyTorch forward.
    return out[:, 0]


if __name__ == "__main__":
    # CLIP ViT-B/32 projection_dim = 512; small batch of "texts".
    B, D = 8, 512

    key = jax.random.PRNGKey(0)
    kx, kw, kb = jax.random.split(key, 3)

    # TODO(synk): the tokenizer + CLIP text encoder (get_text_features) have no
    # clean Pallas equivalent here; the kernel starts from the projected text
    # embeddings the encoder would produce.
    text_embeds = jax.random.normal(kx, (B, D), dtype=jnp.float32).astype(jnp.bfloat16)
    weight = (jax.random.normal(kw, (1, D), dtype=jnp.float32) * 0.02).astype(jnp.bfloat16)
    bias = jax.random.normal(kb, (1,), dtype=jnp.float32) * 0.02

    logits = clip_text_classifier_head(text_embeds, weight, bias)
    logits = jax.block_until_ready(logits)

    # Reference: plain-JAX linear on the same bf16-rounded values, f32 math.
    ref = (text_embeds.astype(jnp.float32) @ weight.astype(jnp.float32).T
           + bias)[:, 0]
    assert logits.shape == (B,)
    assert jnp.allclose(logits, ref, atol=2e-3, rtol=2e-3), (logits, ref)

    print("KERNEL_OK")
</pallas_src>

<mosaic_0001>
module attributes {stable_mosaic.version = 11 : i64} {
  func.func @_classifier_kernel(%arg0: i32, %arg1: memref<8x512xbf16, #tpu.memory_space<vmem>>, %arg2: memref<512x1xbf16, #tpu.memory_space<vmem>>, %arg3: memref<1x1xf32, #tpu.memory_space<smem>>, %arg4: memref<8x1xf32, #tpu.memory_space<vmem>>) attributes {dimension_semantics = [#tpu.dimension_semantics<parallel>], iteration_bounds = array<i64: 1>, scalar_prefetch = 0 : i64, scratch_operands = 0 : i64, tpu.core_type = #tpu.core_type<tc>, window_params = [{transform_indices = @transform_0, window_bounds = array<i64: 8, 512>}, {pipeline_mode = #tpu.pipeline_mode<synchronous>, transform_indices = @transform_1, window_bounds = array<i64: 512, 1>}, {transform_indices = @transform_2, window_bounds = array<i64: 1, 1>}, {transform_indices = @transform_3, window_bounds = array<i64: 8, 1>}]} {
    %c0 = arith.constant 0 : index
    %c0_0 = arith.constant 0 : index
    %0 = vector.load %arg1[%c0, %c0_0] : memref<8x512xbf16, #tpu.memory_space<vmem>>, vector<8x512xbf16>
    %c0_1 = arith.constant 0 : index
    %c0_2 = arith.constant 0 : index
    %1 = vector.load %arg2[%c0_1, %c0_2] : memref<512x1xbf16, #tpu.memory_space<vmem>>, vector<512x1xbf16>
    %cst = arith.constant dense<0.000000e+00> : vector<8x1xf32>
    %2 = tpu.matmul %0, %1, %cst {dimension_numbers = #tpu.dot_dimension_numbers<[1], [0], [0], [1], [0, 0, 1, 1], [], []>} : vector<8x512xbf16>, vector<512x1xbf16>, vector<8x1xf32> -> vector<8x1xf32>
    %c0_3 = arith.constant 0 : index
    %c0_4 = arith.constant 0 : index
    %3 = memref.load %arg3[%c0_3, %c0_4] : memref<1x1xf32, #tpu.memory_space<smem>>
    %4 = vector.broadcast %3 : f32 to vector<8x1xf32>
    %5 = arith.addf %2, %4 : vector<8x1xf32>
    %c0_5 = arith.constant 0 : index
    %c0_6 = arith.constant 0 : index
    %6 = vector.load %arg4[%c0_5, %c0_6] : memref<8x1xf32, #tpu.memory_space<vmem>>, vector<8x1xf32>
    tpu.vector_store %arg4[%c0_5, %c0_6], %5 {strides = array<i32>} : memref<8x1xf32, #tpu.memory_space<vmem>>, vector<8x1xf32>,
    return
  }
  func.func @transform_0(%arg0: i32) -> (i32, i32) {
    %c0_i32 = arith.constant 0 : i32
    %c0_i32_0 = arith.constant 0 : i32
    return %arg0, %c0_i32 : i32, i32
  }
  func.func @transform_1(%arg0: i32) -> (i32, i32) {
    %c0_i32 = arith.constant 0 : i32
    %c0_i32_0 = arith.constant 0 : i32
    %c0_i32_1 = arith.constant 0 : i32
    return %c0_i32, %c0_i32_0 : i32, i32
  }
  func.func @transform_2(%arg0: i32) -> (i32, i32) {
    %c0_i32 = arith.constant 0 : i32
    %c0_i32_0 = arith.constant 0 : i32
    %c0_i32_1 = arith.constant 0 : i32
    return %c0_i32, %c0_i32_0 : i32, i32
  }
  func.func @transform_3(%arg0: i32) -> (i32, i32) {
    %c0_i32 = arith.constant 0 : i32
    %c0_i32_0 = arith.constant 0 : i32
    return %arg0, %c0_i32 : i32, i32
  }
}

</mosaic_0001>

<llo_original>
// kernel: tpu_custom_call.1
$region0: #{tpu_custom_call.1}
  #allocation0 [shape = 'u32[]', space=smem, size = 0x4, offset = 0x4, fixed_abs, tag = 'smem constant byte address 0x4 - core index']
  #allocation1 [shape = 'u32[144,128]{1,0:T(1,128)}', space=vmem, size = 0x12000, scoped, tag = 'internal scratch']
  #allocation2 [shape = 'f32[1,1]{1,0:T(1,128)S(6)}', space=smem, size = 0x200, scoped, tag = 'scoped memory for tpu_custom_call.1']
  %s0 = inlined_call_operand.vmem [shape: bf16[8,512], index: 0, kind: input, shape index: {}]
  %s1 = inlined_call_operand.vmem [shape: bf16[512,1], index: 1, kind: input, shape index: {}]
  %s2 = inlined_call_operand.<no memory space> [shape: f32[1,1], index: 2, kind: input, shape index: {}]
  %s3 = inlined_call_operand.vmem [shape: f32[8,1], index: 3, kind: output, shape index: {}]
  %s4 = sld [smem:[#allocation0]]
  $region22: #{tpu_custom_call.1} parent=0
    _
  %s6 = ssub.s32 1, %s4
  %s7 = scalar_select 0, %s6, %s4
  %8 = sst [smem:[#allocation2]] %s2
  // Predicated region
  $region2: #{tpu_custom_call.1} parent=0 // pred_check
    _
  $region3: #{tpu_custom_call.1} parent=0 // pred_check_branch
    %10 = sbr.rel (0) target = $region5
  $region4: #{tpu_custom_call.1} parent=0 // pred_region
    _
  $region5: #{tpu_custom_call.1} parent=0 // pred_fallthru
    _
  // Predicated region
  $region6: #{tpu_custom_call.1} parent=0 // pred_check
    _
  $region7: #{tpu_custom_call.1} parent=0 // pred_check_branch
    %12 = sbr.rel (0) target = $region9
  $region8: #{tpu_custom_call.1} parent=0 // pred_region
    _
  $region9: #{tpu_custom_call.1} parent=0 // pred_fallthru
    _
  // Predicated region
  $region10: #{tpu_custom_call.1} parent=0 // pred_check
    _
  $region11: #{tpu_custom_call.1} parent=0 // pred_check_branch
    %14 = sbr.rel (0) target = $region13
  $region12: #{tpu_custom_call.1} parent=0 // pred_region
    _
  $region13: #{tpu_custom_call.1} parent=0 // pred_fallthru
    _
  %v16 = vld [vmem:[%s0] sm:$0xff]
  %v17 = vld [vmem:[%s0 + $0x8] sm:$0xff]
  %v18 = vld [vmem:[%s1] sm:$0xf]
  %v19 = vld [vmem:[%s1 + $0x4] sm:$0xf]
  %v20 = vld [vmem:[%s1 + $0x8] sm:$0xf]
  %v21 = vld [vmem:[%s1 + $0xc] sm:$0xf]
  %v22 = vld [vmem:[%s1 + $0x10] sm:$0xf]
  %v23 = vld [vmem:[%s1 + $0x14] sm:$0xf]
  %v24 = vld [vmem:[%s1 + $0x18] sm:$0xf]
  %v25 = vld [vmem:[%s1 + $0x1c] sm:$0xf]
  %v26 = vld [vmem:[%s1 + $0x20] sm:$0xf]
  %v27 = vld [vmem:[%s1 + $0x24] sm:$0xf]
  %v28 = vld [vmem:[%s1 + $0x28] sm:$0xf]
  %v29 = vld [vmem:[%s1 + $0x2c] sm:$0xf]
  %v30 = vld [vmem:[%s1 + $0x30] sm:$0xf]
  %v31 = vld [vmem:[%s1 + $0x34] sm:$0xf]
  %v32 = vld [vmem:[%s1 + $0x38] sm:$0xf]
  %v33 = vld [vmem:[%s1 + $0x3c] sm:$0xf]
  %v34 = vld [vmem:[%s1 + $0x40] sm:$0xf]
  %v35 = vld [vmem:[%s1 + $0x44] sm:$0xf]
  %v36 = vld [vmem:[%s1 + $0x48] sm:$0xf]
  %v37 = vld [vmem:[%s1 + $0x4c] sm:$0xf]
  %v38 = vld [vmem:[%s1 + $0x50] sm:$0xf]
  %v39 = vld [vmem:[%s1 + $0x54] sm:$0xf]
  %v40 = vld [vmem:[%s1 + $0x58] sm:$0xf]
  %v41 = vld [vmem:[%s1 + $0x5c] sm:$0xf]
  %v42 = vld [vmem:[%s1 + $0x60] sm:$0xf]
  %v43 = vld [vmem:[%s1 + $0x64] sm:$0xf]
  %v44 = vld [vmem:[%s1 + $0x68] sm:$0xf]
  %v45 = vld [vmem:[%s1 + $0x6c] sm:$0xf]
  %v46 = vld [vmem:[%s1 + $0x70] sm:$0xf]
  %v47 = vld [vmem:[%s1 + $0x74] sm:$0xf]
  %v48 = vld [vmem:[%s1 + $0x78] sm:$0xf]
  %v49 = vld [vmem:[%s1 + $0x7c] sm:$0xf]
  %v50 = vld [vmem:[%s1 + $0x80] sm:$0xf]
  %v51 = vld [vmem:[%s1 + $0x84] sm:$0xf]
  %v52 = vld [vmem:[%s1 + $0x88] sm:$0xf]
  %v53 = vld [vmem:[%s1 + $0x8c] sm:$0xf]
  %v54 = vld [vmem:[%s1 + $0x90] sm:$0xf]
  %v55 = vld [vmem:[%s1 + $0x94] sm:$0xf]
  %v56 = vld [vmem:[%s1 + $0x98] sm:$0xf]
  %v57 = vld [vmem:[%s1 + $0x9c] sm:$0xf]
  %v58 = vld [vmem:[%s1 + $0xa0] sm:$0xf]
  %v59 = vld [vmem:[%s1 + $0xa4] sm:$0xf]
  %v60 = vld [vmem:[%s1 + $0xa8] sm:$0xf]
  %v61 = vld [vmem:[%s1 + $0xac] sm:$0xf]
  %v62 = vld [vmem:[%s1 + $0xb0] sm:$0xf]
  %v63 = vld [vmem:[%s1 + $0xb4] sm:$0xf]
  %v64 = vld [vmem:[%s1 + $0xb8] sm:$0xf]
  %v65 = vld [vmem:[%s1 + $0xbc] sm:$0xf]
  %v66 = vld [vmem:[%s1 + $0xc0] sm:$0xf]
  %v67 = vld [vmem:[%s1 + $0xc4] sm:$0xf]
  %v68 = vld [vmem:[%s1 + $0xc8] sm:$0xf]
  %v69 = vld [vmem:[%s1 + $0xcc] sm:$0xf]
  %v70 = vld [vmem:[%s1 + $0xd0] sm:$0xf]
  %v71 = vld [vmem:[%s1 + $0xd4] sm:$0xf]
  %v72 = vld [vmem:[%s1 + $0xd8] sm:$0xf]
  %v73 = vld [vmem:[%s1 + $0xdc] sm:$0xf]
  %v74 = vld [vmem:[%s1 + $0xe0] sm:$0xf]
  %v75 = vld [vmem:[%s1 + $0xe4] sm:$0xf]
  %v76 = vld [vmem:[%s1 + $0xe8] sm:$0xf]
  %v77 = vld [vmem:[%s1 + $0xec] sm:$0xf]
  %v78 = vld [vmem:[%s1 + $0xf0] sm:$0xf]
  %v79 = vld [vmem:[%s1 + $0xf4] sm:$0xf]
  %v80 = vld [vmem:[%s1 + $0xf8] sm:$0xf]
  %v81 = vld [vmem:[%s1 + $0xfc] sm:$0xf]
  %s82 = sld [smem:[#allocation2]]
  %v83 = vstv %s82
  %v86 = vunpack.c.l.b16 %v16
  %v87 = vunpack.c.h.b16 %v16
  %v88 = vunpack.c.l.b16 %v17
  %v89 = vunpack.c.h.b16 %v17
  %v90 = vpack.c.b16 %v86, %v86
  %v91 = vpack.c.b16 %v87, %v87
  %v92 = vpack.c.b16 %v88, %v88
  %v93 = vpack.c.b16 %v89, %v89
  %v162 = vunpack.c.l.b16 %v18
  %v163 = vunpack.c.l.b16 %v19
  %v164 = vunpack.c.l.b16 %v20
  %v165 = vunpack.c.l.b16 %v21
  %v166 = vunpack.c.l.b16 %v22
  %v167 = vunpack.c.l.b16 %v23
  %v168 = vunpack.c.l.b16 %v24
  %v169 = vunpack.c.l.b16 %v25
  %v170 = vunpack.c.l.b16 %v26
  %v171 = vunpack.c.l.b16 %v27
  %v172 = vunpack.c.l.b16 %v28
  %v173 = vunpack.c.l.b16 %v29
  %v174 = vunpack.c.l.b16 %v30
  %v175 = vunpack.c.l.b16 %v31
  %v176 = vunpack.c.l.b16 %v32
  %v177 = vunpack.c.l.b16 %v33
  %v178 = vunpack.c.l.b16 %v34
  %v179 = vunpack.c.l.b16 %v35
  %v180 = vunpack.c.l.b16 %v36
  %v181 = vunpack.c.l.b16 %v37
  %v182 = vunpack.c.l.b16 %v38
  %v183 = vunpack.c.l.b16 %v39
  %v184 = vunpack.c.l.b16 %v40
  %v185 = vunpack.c.l.b16 %v41
  %v186 = vunpack.c.l.b16 %v42
  %v187 = vunpack.c.l.b16 %v43
  %v188 = vunpack.c.l.b16 %v44
  %v189 = vunpack.c.l.b16 %v45
  %v190 = vunpack.c.l.b16 %v46
  %v191 = vunpack.c.l.b16 %v47
  %v192 = vunpack.c.l.b16 %v48
  %v193 = vunpack.c.l.b16 %v49
  %v194 = vunpack.c.l.b16 %v50
  %v195 = vunpack.c.l.b16 %v51
  %v196 = vunpack.c.l.b16 %v52
  %v197 = vunpack.c.l.b16 %v53
  %v198 = vunpack.c.l.b16 %v54
  %v199 = vunpack.c.l.b16 %v55
  %v200 = vunpack.c.l.b16 %v56
  %v201 = vunpack.c.l.b16 %v57
  %v202 = vunpack.c.l.b16 %v58
  %v203 = vunpack.c.l.b16 %v59
  %v204 = vunpack.c.l.b16 %v60
  %v205 = vunpack.c.l.b16 %v61
  %v206 = vunpack.c.l.b16 %v62
  %v207 = vunpack.c.l.b16 %v63
  %v208 = vunpack.c.l.b16 %v64
  %v209 = vunpack.c.l.b16 %v65
  %v210 = vunpack.c.l.b16 %v66
  %v211 = vunpack.c.l.b16 %v67
  %v212 = vunpack.c.l.b16 %v68
  %v213 = vunpack.c.l.b16 %v69
  %v214 = vunpack.c.l.b16 %v70
  %v215 = vunpack.c.l.b16 %v71
  %v216 = vunpack.c.l.b16 %v72
  %v217 = vunpack.c.l.b16 %v73
  %v218 = vunpack.c.l.b16 %v74
  %v219 = vunpack.c.l.b16 %v75
  %v220 = vunpack.c.l.b16 %v76
  %v221 = vunpack.c.l.b16 %v77
  %v222 = vunpack.c.l.b16 %v78
  %v223 = vunpack.c.l.b16 %v79
  %v224 = vunpack.c.l.b16 %v80
  %v225 = vunpack.c.l.b16 %v81
  %v226 = vpack.c.b16 %v163, %v162
  %v227 = vpack.c.b16 %v165, %v164
  %v228 = vpack.c.b16 %v167, %v166
  %v229 = vpack.c.b16 %v169, %v168
  %v230 = vpack.c.b16 %v171, %v170
  %v231 = vpack.c.b16 %v173, %v172
  %v232 = vpack.c.b16 %v175, %v174
  %v233 = vpack.c.b16 %v177, %v176
  %v234 = vpack.c.b16 %v179, %v178
  %v235 = vpack.c.b16 %v181, %v180
  %v236 = vpack.c.b16 %v183, %v182
  %v237 = vpack.c.b16 %v185, %v184
  %v238 = vpack.c.b16 %v187, %v186
  %v239 = vpack.c.b16 %v189, %v188
  %v240 = vpack.c.b16 %v191, %v190
  %v241 = vpack.c.b16 %v193, %v192
  %v242 = vpack.c.b16 %v195, %v194
  %v243 = vpack.c.b16 %v197, %v196
  %v244 = vpack.c.b16 %v199, %v198
  %v245 = vpack.c.b16 %v201, %v200
  %v246 = vpack.c.b16 %v203, %v202
  %v247 = vpack.c.b16 %v205, %v204
  %v248 = vpack.c.b16 %v207, %v206
  %v249 = vpack.c.b16 %v209, %v208
  %v250 = vpack.c.b16 %v211, %v210
  %v251 = vpack.c.b16 %v213, %v212
  %v252 = vpack.c.b16 %v215, %v214
  %v253 = vpack.c.b16 %v217, %v216
  %v254 = vpack.c.b16 %v219, %v218
  %v255 = vpack.c.b16 %v221, %v220
  %v256 = vpack.c.b16 %v223, %v222
  %v257 = vpack.c.b16 %v225, %v224
  %290 = vmatprep.subr.bf16.mxu0 0
  %291 = vmatpush1.bf16.msra.mxu0 %v226
  %292 = vmatprep.subr.bf16.mxu0 0
  %293 = vmatpush1.bf16.msra.mxu0 %v227
  %294 = vmatprep.subr.bf16.mxu0 0
  %295 = vmatpush1.bf16.msra.mxu0 %v228
  %296 = vmatprep.subr.bf16.mxu0 0
  %297 = vmatpush1.bf16.msra.mxu0 %v229
  %298 = vmatprep.subr.bf16.mxu0 0
  %299 = vmatpush1.bf16.msra.mxu0 %v230
  %300 = vmatprep.subr.bf16.mxu0 0
  %301 = vmatpush1.bf16.msra.mxu0 %v231
  %302 = vmatprep.subr.bf16.mxu0 0
  %303 = vmatpush1.bf16.msra.mxu0 %v232
  %304 = vmatprep.subr.bf16.mxu0 0
  %305 = vmatpush1.bf16.msra.mxu0 %v233
  %306 = vmatprep.subr.bf16.mxu0 0
  %307 = vmatpush1.bf16.msra.mxu0 %v234
  %308 = vmatprep.subr.bf16.mxu0 0
  %309 = vmatpush1.bf16.msra.mxu0 %v235
  %310 = vmatprep.subr.bf16.mxu0 0
  %311 = vmatpush1.bf16.msra.mxu0 %v236
  %312 = vmatprep.subr.bf16.mxu0 0
  %313 = vmatpush1.bf16.msra.mxu0 %v237
  %314 = vmatprep.subr.bf16.mxu0 0
  %315 = vmatpush1.bf16.msra.mxu0 %v238
  %316 = vmatprep.subr.bf16.mxu0 0
  %317 = vmatpush1.bf16.msra.mxu0 %v239
  %318 = vmatprep.subr.bf16.mxu0 0
  %319 = vmatpush1.bf16.msra.mxu0 %v240
  %320 = vmatprep.subr.bf16.mxu0 0
  %321 = vmatpush1.bf16.msra.mxu0 %v241
  %322 = vmatprep.mubr.bf16.mxu0 %v91
  %323 = vmatmul.mubr.bf16.gmra.mrb[0].mxu0 %v90
  %v324 = vpop.f32.mrb[0].mxu0
  %v325 = vadd.f32 %v83, %v324
  %v326 = vpop.f32.mrb[0].mxu0
  %v327 = vpop.f32.mrb[0].mxu0
  %v328 = vpop.f32.mrb[0].mxu0
  %329 = vdwg.mxu0
  %330 = vmatprep.subr.bf16.mxu0 0
  %331 = vmatpush1.bf16.msra.mxu0 %v242
  %332 = vmatprep.subr.bf16.mxu0 0
  %333 = vmatpush1.bf16.msra.mxu0 %v243
  %334 = vmatprep.subr.bf16.mxu0 0
  %335 = vmatpush1.bf16.msra.mxu0 %v244
  %336 = vmatprep.subr.bf16.mxu0 0
  %337 = vmatpush1.bf16.msra.mxu0 %v245
  %338 = vmatprep.subr.bf16.mxu0 0
  %339 = vmatpush1.bf16.msra.mxu0 %v246
  %340 = vmatprep.subr.bf16.mxu0 0
  %341 = vmatpush1.bf16.msra.mxu0 %v247
  %342 = vmatprep.subr.bf16.mxu0 0
  %343 = vmatpush1.bf16.msra.mxu0 %v248
  %344 = vmatprep.subr.bf16.mxu0 0
  %345 = vmatpush1.bf16.msra.mxu0 %v249
  %346 = vmatprep.subr.bf16.mxu0 0
  %347 = vmatpush1.bf16.msra.mxu0 %v250
  %348 = vmatprep.subr.bf16.mxu0 0
  %349 = vmatpush1.bf16.msra.mxu0 %v251
  %350 = vmatprep.subr.bf16.mxu0 0
  %351 = vmatpush1.bf16.msra.mxu0 %v252
  %352 = vmatprep.subr.bf16.mxu0 0
  %353 = vmatpush1.bf16.msra.mxu0 %v253
  %354 = vmatprep.subr.bf16.mxu0 0
  %355 = vmatpush1.bf16.msra.mxu0 %v254
  %356 = vmatprep.subr.bf16.mxu0 0
  %357 = vmatpush1.bf16.msra.mxu0 %v255
  %358 = vmatprep.subr.bf16.mxu0 0
  %359 = vmatpush1.bf16.msra.mxu0 %v256
  %360 = vmatprep.subr.bf16.mxu0 0
  %361 = vmatpush1.bf16.msra.mxu0 %v257
  %362 = vmatprep.mubr.bf16.mxu0 %v93
  %363 = vmatmul.mubr.bf16.gmra.mrb[0].mxu0 %v92
  %v364 = vpop.f32.mrb[0].mxu0
  %v365 = vadd.f32 %v325, %v364
  %v366 = vpop.f32.mrb[0].mxu0
  %v367 = vpop.f32.mrb[0].mxu0
  %v368 = vpop.f32.mrb[0].mxu0
  %369 = vdwg.mxu0
  %vm370 = vcmask 7168
  %371 = vst.msk [vmem:[%s3] sm:$0xff] %vm370, %v365
  // Predicated region
  $region14: #{tpu_custom_call.1} parent=0 // pred_check
    _
  $region15: #{tpu_custom_call.1} parent=0 // pred_check_branch
    %373 = sbr.rel (0) target = $region17
  $region16: #{tpu_custom_call.1} parent=0 // pred_region
    _
  $region17: #{tpu_custom_call.1} parent=0 // pred_fallthru
    _
  // Predicated region
  $region18: #{tpu_custom_call.1} parent=0 // pred_check
    _
  $region19: #{tpu_custom_call.1} parent=0 // pred_check_branch
    %375 = sbr.rel (0) target = $region21
  $region20: #{tpu_custom_call.1} parent=0 // pred_region
    _
  $region21: #{tpu_custom_call.1} parent=0 // pred_fallthru
    _

</llo_original>
